<compile_context>
chip_gen: v7x
topology: tpu7x:2x2x1
jax: 0.10.0
libtpu: 0.0.40
codegen_flags: <defaults>
</compile_context>

<pallas_src>
import functools
import numpy as np

import jax
import jax.numpy as jnp
from jax import lax
from jax.experimental import pallas as pl
from jax.experimental.pallas import tpu as pltpu


LANE = 128


def _round_up(n: int, m: int = LANE) -> int:
    return ((n + m - 1) // m) * m


@functools.lru_cache(maxsize=None)
def _vmem_ceiling() -> int:
    """Per-core VMEM budget with headroom for Mosaic scratch / double buffers."""
    cap = 64 * 1024 * 1024                      # conservative default (v7x per-TC)
    try:
        info = pltpu.get_tpu_info()
        cap = int(getattr(info, "vmem_capacity_bytes", cap)) or cap
    except Exception:
        pass
    return max(16 * 1024 * 1024, (cap * 3) // 4)


def _vmem_limit(nbytes_hint: int) -> int:
    return int(max(16 * 1024 * 1024, min(_vmem_ceiling(), int(nbytes_hint))))


def _pad2(x, npad: int):
    n0, n1 = x.shape
    return jnp.pad(x, ((0, npad - n0), (0, npad - n1)))


def _pick_tile(npad: int) -> int:
    for t in (512, 256):
        if npad % t == 0:
            return t
    return 128


# ----------------------------------------------------------------------------
# Deterministic "parameter" setup: the toroidal distance grid (module __init__)
# ----------------------------------------------------------------------------
def calculate_distance_grid(s: int) -> np.ndarray:
    """Squared toroidal distance between every pair of 1-d coordinates."""
    size = np.array([s, s], dtype=np.int64)
    n = s * s
    coords = np.array([[c // s, c - (c // s) * s] for c in range(n)], dtype=np.int64)
    D = np.zeros((n, n), dtype=np.float32)
    for j in range(n):
        for i in range(n):
            A, B = coords[i], coords[j]
            wrap = np.abs(size + np.minimum(A, B) - np.maximum(A, B))
            nowrap = np.abs(A - B)
            D[j, i] = float(np.sum(np.minimum(wrap, nowrap) ** 2))
    return D  # symmetric by construction


# ----------------------------------------------------------------------------
# Kernel 1: tiled matmul (used twice per grad: T = D @ G, grad = T @ D ;
#           D is symmetric so no transpose is ever materialized)
# ----------------------------------------------------------------------------
def _matmul_kernel(a_ref, b_ref, o_ref, acc_ref):
    @pl.when(pl.program_id(2) == 0)
    def _():
        acc_ref[...] = jnp.zeros_like(acc_ref)

    acc_ref[...] += jnp.dot(a_ref[...], b_ref[...],
                            preferred_element_type=jnp.float32)

    @pl.when(pl.program_id(2) == pl.num_programs(2) - 1)
    def _():
        o_ref[...] = acc_ref[...].astype(o_ref.dtype)


@functools.lru_cache(maxsize=None)
def _tiled_matmul(npad: int, out_dtype: str):
    tile = _pick_tile(npad)
    g = npad // tile
    # 2 inputs double-buffered + output + f32 accumulator (f32 worst case)
    hint = 28 * tile * tile + (8 << 20)
    return pl.pallas_call(
        _matmul_kernel,
        grid=(g, g, g),
        in_specs=[pl.BlockSpec((tile, tile), lambda i, j, k: (i, k)),
                  pl.BlockSpec((tile, tile), lambda i, j, k: (k, j))],
        out_specs=pl.BlockSpec((tile, tile), lambda i, j, k: (i, j)),
        out_shape=jax.ShapeDtypeStruct((npad, npad), jnp.dtype(out_dtype)),
        scratch_shapes=[pltpu.VMEM((tile, tile), jnp.float32)],
        compiler_params=pltpu.CompilerParams(
            dimension_semantics=("parallel", "parallel", "arbitrary"),
            vmem_limit_bytes=_vmem_limit(hint)),
    )


@functools.lru_cache(maxsize=None)
def _loss_grad_fn(npad: int):
    mm = _tiled_matmul(npad, "float32")

    def f(dp, gp):
        grad = mm(mm(dp, gp), dp)           # D @ G @ D   (D symmetric)
        loss = 0.5 * jnp.sum(gp * grad)
        return loss, grad

    return jax.jit(f)


def grid_loss_and_grad(D, G):
    """grid_loss = 0.5*einsum('ab,cd,ac,bd->', G, G, D, D); grad = D @ G @ D."""
    n = int(D.shape[0])
    npad = _round_up(n)
    dp = _pad2(jnp.asarray(D, jnp.float32), npad)
    gp = _pad2(jnp.asarray(G, jnp.float32), npad)
    loss, gradp = _loss_grad_fn(npad)(dp, gp)
    return loss, gradp[:n, :n]


# ----------------------------------------------------------------------------
# Kernel 2: fused, masked elementwise optim update (matmul-free)
#   fix_grad (masked RAS in scale-vector form - 1/n_kept) ; masked-mean lr ;
#   grid update ; branchless fix_grid.  Only kept (unrevealed, unpadded) cells
#   are touched.  One small pallas_call per optim step; data stays on device.
# ----------------------------------------------------------------------------
def _make_elem_step_kernel(n_ras: int):
    def kernel(grad_ref, g_ref, rm_ref, cm_ref, out_ref, out_bf16_ref, lr_ref):
        M = grad_ref[...]                     # f32 raw gradient D @ G @ D
        G = g_ref[...]
        rm = rm_ref[...]                      # (Np, 1): 1.0 = kept row
        cm = cm_ref[...]                      # (1, Np): 1.0 = kept col
        keep = rm * cm                        # kept-block indicator
        n_kept = jnp.sum(rm)                  # kept rows == kept cols
        eps = jnp.float32(1e-30)

        # fix_grad: masked RAS (Sinkhorn) in scale-vector form.
        #   a_k = diag(R) * (grad * keep) * diag(C)  -- never materialized until
        #   the end: 2 full-matrix reads / iteration, 0 intermediate writes.
        #   Vector reciprocals are exact (cheap: only Np elements) -> no drift.
        R = rm
        C = cm
        for _ in range(n_ras):
            v = jnp.sum(M * C, axis=1, keepdims=True)        # row sums / R
            R = rm * jnp.where(v > eps, 1.0 / v, 0.0)
            w = jnp.sum(M * R, axis=0, keepdims=True)        # col sums / C
            C = cm * jnp.where(w > eps, 1.0 / w, 0.0)

        inv_nk = 1.0 / jnp.maximum(n_kept, 1.0)
        fg = M * R * C - inv_nk               # zero-line-sum gradient (kept block)

        # masked-mean learning rate over kept cells with positive fixed grad
        pos = jnp.logical_and(fg > 0.0, keep > 0.0)
        cnt = jnp.sum(pos.astype(jnp.float32))
        inv_fg = pl.reciprocal(jnp.where(pos, fg, 1.0), approx=True)   # EUP slot
        alpha_sum = jnp.sum(jnp.where(pos, G * inv_fg, 0.0))
        lr = jnp.where(cnt > 0.0, alpha_sum / jnp.maximum(cnt, 1.0), 0.0)

        # gradient step + fix_grid (branchless: offset = max(-min, 0))
        new = G - lr * fg
        minv = jnp.min(jnp.where(keep > 0.0, new, jnp.float32(1e30)))
        offset = jnp.maximum(-minv, 0.0)
        fixed = (new + offset) * (1.0 / (n_kept * offset + 1.0))

        result = jnp.where(keep > 0.0, fixed, G)
        out_ref[...] = result
        out_bf16_ref[...] = result.astype(jnp.bfloat16)   # MXU operand, next step
        lr_ref[0, 0] = lr

    return kernel


@functools.lru_cache(maxsize=None)
def _elem_step_fn(npad: int, n_ras: int):
    hint = 28 * npad * npad + (16 << 20)
    return pl.pallas_call(
        _make_elem_step_kernel(n_ras),
        grid=(1,),
        in_specs=[pl.BlockSpec((npad, npad), lambda i: (0, 0)),   # grad (f32)
                  pl.BlockSpec((npad, npad), lambda i: (0, 0)),   # grid (f32)
                  pl.BlockSpec((npad, 1), lambda i: (0, 0)),      # row mask
                  pl.BlockSpec((1, npad), lambda i: (0, 0))],     # col mask
        out_specs=(pl.BlockSpec((npad, npad), lambda i: (0, 0)),
                   pl.BlockSpec((npad, npad), lambda i: (0, 0)),
                   pl.BlockSpec(memory_space=pltpu.MemorySpace.SMEM)),
        out_shape=(jax.ShapeDtypeStruct((npad, npad), jnp.float32),
                   jax.ShapeDtypeStruct((npad, npad), jnp.bfloat16),
                   jax.ShapeDtypeStruct((1, 1), jnp.float32)),
        input_output_aliases={1: 0},          # update the grid in place
        compiler_params=pltpu.CompilerParams(
            dimension_semantics=("arbitrary",),
            vmem_limit_bytes=_vmem_limit(hint)),
    )


@functools.lru_cache(maxsize=None)
def _run_optim_fn(npad: int, n_ras: int, optim: int):
    """One jitted call for the whole inner optim loop + on-device reveal argmax."""
    mm_bf16 = _tiled_matmul(npad, "bfloat16")   # T = D @ G     (bf16 MXU, bf16 out)
    mm_f32 = _tiled_matmul(npad, "float32")     # grad = T @ D  (bf16 MXU, f32 out)
    elem = _elem_step_fn(npad, n_ras)

    def run(d_bf16, g0, rm, cm):
        g0_bf16 = g0.astype(jnp.bfloat16)

        def body(_, carry):
            g, gb, done = carry

            def do_step(args):
                g_in, gb_in = args
                t = mm_bf16(d_bf16, gb_in)              # D @ G
                grad = mm_f32(t, d_bf16)                # (D @ G) @ D
                g_new, gb_new, lr = elem(grad, g_in, rm, cm)
                return g_new, gb_new, lr[0, 0] == 0.0   # original breaks on lr == 0

            def skip(args):
                g_in, gb_in = args
                return g_in, gb_in, jnp.array(True)

            g, gb, done = lax.cond(done, skip, do_step, (g, gb))
            return g, gb, done

        g, _, _ = lax.fori_loop(0, optim, body, (g0, g0_bf16, jnp.array(False)))
        # reveal selection: argmax with revealed rows/cols (and padding) zeroed
        idx = jnp.argmax(g * rm * cm)
        return g, idx

    return jax.jit(run)


# ----------------------------------------------------------------------------
# Host-side glue reproducing discretization + the (truncated) forward driver
# ----------------------------------------------------------------------------
def discretization(grid):
    g = np.array(grid, dtype=np.float32, copy=True)
    n = g.shape[0]
    disc = np.zeros((n, n), dtype=np.float32)
    while (g >= 0).any():           # host-sequential greedy assignment
        idx = divmod(int(np.argmax(g)), n)
        disc[idx] = 1.0
        g[idx[0], :] = -1.0
        g[:, idx[1]] = -1.0
    return disc


def grid_forward(D, optim=2, n_ras=4, n_outer=3):
    """Simplified Grid.forward: outer reveal loop truncated to n_outer iters.

    TODO(synk): tensorboard logging, write_grid file output, lower_bounds.txt
    and cache/*.pth loading have no Pallas/JAX equivalent and are omitted.
    """
    N = int(D.shape[0])
    npad = _round_up(N)
    d_np = np.zeros((npad, npad), np.float32)
    d_np[:N, :N] = np.asarray(D, np.float32)
    d_bf16 = jnp.asarray(d_np).astype(jnp.bfloat16)    # constant: cast once
    run = _run_optim_fn(npad, n_ras, optim)

    revealed = []
    grid_host = np.ones((N, N), np.float32) / N

    for it in range(n_outer):                      # original iterates range(N)
        k = len(revealed)
        grid_host = np.ones((N, N), np.float32) / (N - k)
        rmask = np.ones((N,), np.float32)
        cmask = np.ones((N,), np.float32)
        for (r, c) in revealed:
            grid_host[r, :] = 0.0
            grid_host[:, c] = 0.0
            grid_host[r, c] = 1.0
            rmask[r] = 0.0
            cmask[c] = 0.0

        g0 = np.zeros((npad, npad), np.float32)
        g0[:N, :N] = grid_host
        rm = np.zeros((npad, 1), np.float32)
        rm[:N, 0] = rmask
        cm = np.zeros((1, npad), np.float32)
        cm[0, :N] = cmask

        g_fin, idx = run(d_bf16, jnp.asarray(g0), jnp.asarray(rm), jnp.asarray(cm))
        r, c = divmod(int(idx), npad)              # scalar sync only
        revealed.append((r, c))
        if it == n_outer - 1:                      # grid only needed at the end
            grid_host = np.asarray(g_fin)[:N, :N]

    disc = discretization(grid_host)
    final_loss, _ = grid_loss_and_grad(D, jnp.asarray(disc))
    lower_bound = 0.0  # TODO(synk): real lower bound comes from lower_bounds.txt
    return float(final_loss) - lower_bound


# ----------------------------------------------------------------------------
if __name__ == "__main__":
    s = 4                       # toroidal grid is s x s  ->  N = s**2 = 16
    N = s * s
    D = calculate_distance_grid(s)                # (16, 16) float32, symmetric

    # deterministic example superposition grid
    key = jax.random.PRNGKey(0)
    G = jax.random.uniform(key, (N, N), jnp.float32, minval=0.1, maxval=1.0)

    # f32 tiled loss/grad kernels (final objective-loss path) vs plain JAX
    loss, grad = grid_loss_and_grad(D, G)
    jax.block_until_ready((loss, grad))
    Dj = jnp.asarray(D, jnp.float32)
    ref_grad = Dj @ G @ Dj.T
    ref_loss = 0.5 * jnp.sum(G * ref_grad)
    assert np.allclose(np.asarray(grad), np.asarray(ref_grad), rtol=1e-4, atol=1e-3)
    assert np.allclose(float(loss), float(ref_loss), rtol=1e-4, atol=1e-3)

    # bf16-MXU grad path (optim-loop hot path): loose check vs f32 reference
    npad = _round_up(N)
    dpb = _pad2(Dj, npad).astype(jnp.bfloat16)
    gpb = _pad2(G, npad).astype(jnp.bfloat16)
    mm_b = _tiled_matmul(npad, "bfloat16")
    mm_f = _tiled_matmul(npad, "float32")
    grad_b = np.asarray(mm_f(mm_b(dpb, gpb), dpb))[:N, :N]
    assert np.allclose(grad_b, np.asarray(ref_grad), rtol=3e-2, atol=1e-1)

    # exercise the split matmul + fused masked update kernel via the driver
    final_loss = grid_forward(D, optim=2, n_ras=4, n_outer=3)
    assert np.isfinite(final_loss)

    print("KERNEL_OK")
</pallas_src>

<mosaic_0001>
module attributes {stable_mosaic.version = 11 : i64} {
  func.func @_matmul_kernel(%arg0: i32, %arg1: i32, %arg2: i32, %arg3: memref<128x128xf32, #tpu.memory_space<vmem>>, %arg4: memref<128x128xf32, #tpu.memory_space<vmem>>, %arg5: memref<128x128xf32, #tpu.memory_space<vmem>>, %arg6: memref<128x128xf32, #tpu.memory_space<vmem>>) attributes {dimension_semantics = [#tpu.dimension_semantics<parallel>, #tpu.dimension_semantics<parallel>, #tpu.dimension_semantics<arbitrary>], iteration_bounds = array<i64: 1, 1, 1>, scalar_prefetch = 0 : i64, scratch_operands = 1 : i64, tpu.core_type = #tpu.core_type<tc>, window_params = [{transform_indices = @transform_0, window_bounds = array<i64: 128, 128>}, {transform_indices = @transform_1, window_bounds = array<i64: 128, 128>}, {transform_indices = @transform_2, window_bounds = array<i64: 128, 128>}]} {
    %c0_i32 = arith.constant 0 : i32
    %0 = arith.cmpi eq, %arg2, %c0_i32 : i32
    %1 = arith.extui %0 : i1 to i32
    %c0_i32_0 = arith.constant 0 : i32
    %2 = arith.cmpi ne, %1, %c0_i32_0 : i32
    scf.if %2 {
      %cst_10 = arith.constant 0.000000e+00 : f32
      %12 = vector.broadcast %cst_10 : f32 to vector<128x128xf32>
      %c0_11 = arith.constant 0 : index
      %c0_12 = arith.constant 0 : index
      %13 = vector.load %arg6[%c0_11, %c0_12] : memref<128x128xf32, #tpu.memory_space<vmem>>, vector<128x128xf32>
      tpu.vector_store %arg6[%c0_11, %c0_12], %12 {strides = array<i32>} : memref<128x128xf32, #tpu.memory_space<vmem>>, vector<128x128xf32>,
    } else {
    }
    %c0 = arith.constant 0 : index
    %c0_1 = arith.constant 0 : index
    %3 = vector.load %arg6[%c0, %c0_1] : memref<128x128xf32, #tpu.memory_space<vmem>>, vector<128x128xf32>
    %c0_2 = arith.constant 0 : index
    %c0_3 = arith.constant 0 : index
    %4 = vector.load %arg3[%c0_2, %c0_3] : memref<128x128xf32, #tpu.memory_space<vmem>>, vector<128x128xf32>
    %c0_4 = arith.constant 0 : index
    %c0_5 = arith.constant 0 : index
    %5 = vector.load %arg4[%c0_4, %c0_5] : memref<128x128xf32, #tpu.memory_space<vmem>>, vector<128x128xf32>
    %cst = arith.constant dense<0.000000e+00> : vector<128x128xf32>
    %6 = tpu.matmul %4, %5, %cst {dimension_numbers = #tpu.dot_dimension_numbers<[1], [0], [0], [1], [0, 0, 1, 1], [], []>} : vector<128x128xf32>, vector<128x128xf32>, vector<128x128xf32> -> vector<128x128xf32>
    %7 = arith.addf %3, %6 : vector<128x128xf32>
    %c0_6 = arith.constant 0 : index
    %c0_7 = arith.constant 0 : index
    %8 = vector.load %arg6[%c0_6, %c0_7] : memref<128x128xf32, #tpu.memory_space<vmem>>, vector<128x128xf32>
    tpu.vector_store %arg6[%c0_6, %c0_7], %7 {strides = array<i32>} : memref<128x128xf32, #tpu.memory_space<vmem>>, vector<128x128xf32>,
    %c0_i32_8 = arith.constant 0 : i32
    %9 = arith.cmpi eq, %arg2, %c0_i32_8 : i32
    %10 = arith.extui %9 : i1 to i32
    %c0_i32_9 = arith.constant 0 : i32
    %11 = arith.cmpi ne, %10, %c0_i32_9 : i32
    scf.if %11 {
      %c0_10 = arith.constant 0 : index
      %c0_11 = arith.constant 0 : index
      %12 = vector.load %arg6[%c0_10, %c0_11] : memref<128x128xf32, #tpu.memory_space<vmem>>, vector<128x128xf32>
      %c0_12 = arith.constant 0 : index
      %c0_13 = arith.constant 0 : index
      %13 = vector.load %arg5[%c0_12, %c0_13] : memref<128x128xf32, #tpu.memory_space<vmem>>, vector<128x128xf32>
      tpu.vector_store %arg5[%c0_12, %c0_13], %12 {strides = array<i32>} : memref<128x128xf32, #tpu.memory_space<vmem>>, vector<128x128xf32>,
    } else {
    }
    return
  }
  func.func @transform_0(%arg0: i32, %arg1: i32, %arg2: i32) -> (i32, i32) {
    %c0_i32 = arith.constant 0 : i32
    return %arg0, %arg2 : i32, i32
  }
  func.func @transform_1(%arg0: i32, %arg1: i32, %arg2: i32) -> (i32, i32) {
    %c0_i32 = arith.constant 0 : i32
    return %arg2, %arg1 : i32, i32
  }
  func.func @transform_2(%arg0: i32, %arg1: i32, %arg2: i32) -> (i32, i32) {
    %c0_i32 = arith.constant 0 : i32
    return %arg0, %arg1 : i32, i32
  }
}

module attributes {stable_mosaic.version = 11 : i64} {
  func.func @_matmul_kernel(%arg0: i32, %arg1: i32, %arg2: i32, %arg3: memref<128x128xf32, #tpu.memory_space<vmem>>, %arg4: memref<128x128xf32, #tpu.memory_space<vmem>>, %arg5: memref<128x128xf32, #tpu.memory_space<vmem>>, %arg6: memref<128x128xf32, #tpu.memory_space<vmem>>) attributes {dimension_semantics = [#tpu.dimension_semantics<parallel>, #tpu.dimension_semantics<parallel>, #tpu.dimension_semantics<arbitrary>], iteration_bounds = array<i64: 1, 1, 1>, scalar_prefetch = 0 : i64, scratch_operands = 1 : i64, tpu.core_type = #tpu.core_type<tc>, window_params = [{transform_indices = @transform_0, window_bounds = array<i64: 128, 128>}, {transform_indices = @transform_1, window_bounds = array<i64: 128, 128>}, {transform_indices = @transform_2, window_bounds = array<i64: 128, 128>}]} {
    %c0_i32 = arith.constant 0 : i32
    %0 = arith.cmpi eq, %arg2, %c0_i32 : i32
    %1 = arith.extui %0 : i1 to i32
    %c0_i32_0 = arith.constant 0 : i32
    %2 = arith.cmpi ne, %1, %c0_i32_0 : i32
    scf.if %2 {
      %cst_10 = arith.constant 0.000000e+00 : f32
      %12 = vector.broadcast %cst_10 : f32 to vector<128x128xf32>
      %c0_11 = arith.constant 0 : index
      %c0_12 = arith.constant 0 : index
      %13 = vector.load %arg6[%c0_11, %c0_12] : memref<128x128xf32, #tpu.memory_space<vmem>>, vector<128x128xf32>
      tpu.vector_store %arg6[%c0_11, %c0_12], %12 {strides = array<i32>} : memref<128x128xf32, #tpu.memory_space<vmem>>, vector<128x128xf32>,
    } else {
    }
    %c0 = arith.constant 0 : index
    %c0_1 = arith.constant 0 : index
    %3 = vector.load %arg6[%c0, %c0_1] : memref<128x128xf32, #tpu.memory_space<vmem>>, vector<128x128xf32>
    %c0_2 = arith.constant 0 : index
    %c0_3 = arith.constant 0 : index
    %4 = vector.load %arg3[%c0_2, %c0_3] : memref<128x128xf32, #tpu.memory_space<vmem>>, vector<128x128xf32>
    %c0_4 = arith.constant 0 : index
    %c0_5 = arith.constant 0 : index
    %5 = vector.load %arg4[%c0_4, %c0_5] : memref<128x128xf32, #tpu.memory_space<vmem>>, vector<128x128xf32>
    %cst = arith.constant dense<0.000000e+00> : vector<128x128xf32>
    %6 = tpu.matmul %4, %5, %cst {dimension_numbers = #tpu.dot_dimension_numbers<[1], [0], [0], [1], [0, 0, 1, 1], [], []>} : vector<128x128xf32>, vector<128x128xf32>, vector<128x128xf32> -> vector<128x128xf32>
    %7 = arith.addf %3, %6 : vector<128x128xf32>
    %c0_6 = arith.constant 0 : index
    %c0_7 = arith.constant 0 : index
    %8 = vector.load %arg6[%c0_6, %c0_7] : memref<128x128xf32, #tpu.memory_space<vmem>>, vector<128x128xf32>
    tpu.vector_store %arg6[%c0_6, %c0_7], %7 {strides = array<i32>} : memref<128x128xf32, #tpu.memory_space<vmem>>, vector<128x128xf32>,
    %c0_i32_8 = arith.constant 0 : i32
    %9 = arith.cmpi eq, %arg2, %c0_i32_8 : i32
    %10 = arith.extui %9 : i1 to i32
    %c0_i32_9 = arith.constant 0 : i32
    %11 = arith.cmpi ne, %10, %c0_i32_9 : i32
    scf.if %11 {
      %c0_10 = arith.constant 0 : index
      %c0_11 = arith.constant 0 : index
      %12 = vector.load %arg6[%c0_10, %c0_11] : memref<128x128xf32, #tpu.memory_space<vmem>>, vector<128x128xf32>
      %c0_12 = arith.constant 0 : index
      %c0_13 = arith.constant 0 : index
      %13 = vector.load %arg5[%c0_12, %c0_13] : memref<128x128xf32, #tpu.memory_space<vmem>>, vector<128x128xf32>
      tpu.vector_store %arg5[%c0_12, %c0_13], %12 {strides = array<i32>} : memref<128x128xf32, #tpu.memory_space<vmem>>, vector<128x128xf32>,
    } else {
    }
    return
  }
  func.func @transform_0(%arg0: i32, %arg1: i32, %arg2: i32) -> (i32, i32) {
    %c0_i32 = arith.constant 0 : i32
    return %arg0, %arg2 : i32, i32
  }
  func.func @transform_1(%arg0: i32, %arg1: i32, %arg2: i32) -> (i32, i32) {
    %c0_i32 = arith.constant 0 : i32
    return %arg2, %arg1 : i32, i32
  }
  func.func @transform_2(%arg0: i32, %arg1: i32, %arg2: i32) -> (i32, i32) {
    %c0_i32 = arith.constant 0 : i32
    return %arg0, %arg1 : i32, i32
  }
}

</mosaic_0001>

<llo_original>
// kernel: f.3
$region0: #{f.3}
  #allocation0 [shape = 'u32[]', space=smem, size = 0x4, offset = 0x4, fixed_abs, tag = 'smem constant byte address 0x4 - core index']
  #allocation1 [shape = 'u32[144,128]{1,0:T(1,128)}', space=vmem, size = 0x12000, scoped, tag = 'internal scratch']
  #allocation2 [shape = 'f32[128,128]{1,0:T(8,128)}', space=vmem, size = 0x10000, scoped, tag = 'scratch operand']
  %s0 = inlined_call_operand.vmem [shape: f32[128,128], index: 0, kind: input, shape index: {}]
  %s1 = inlined_call_operand.vmem [shape: f32[128,128], index: 1, kind: input, shape index: {}]
  %s2 = inlined_call_operand.vmem [shape: f32[128,128], index: 2, kind: output, shape index: {}]
  %s3 = sld [smem:[#allocation0]]
  $region26: #{f.3} parent=0
    _
  %s5 = ssub.s32 1, %s3
  %s6 = scalar_select 0, %s5, %s3
  // Predicated region
  $region2: #{f.3} parent=0 // pred_check
    _
  $region3: #{f.3} parent=0 // pred_check_branch
    %8 = sbr.rel (0) target = $region5
  $region4: #{f.3} parent=0 // pred_region
    _
  $region5: #{f.3} parent=0 // pred_fallthru
    _
  // Predicated region
  $region6: #{f.3} parent=0 // pred_check
    _
  $region7: #{f.3} parent=0 // pred_check_branch
    %10 = sbr.rel (0) target = $region9
  $region8: #{f.3} parent=0 // pred_region
    _
  $region9: #{f.3} parent=0 // pred_fallthru
    _
  %p11 = scmp.eq.s32.totalorder 0, 0
  // Predicated region
  $region10: #{f.3} parent=0 // pred_check
    %p12 = pneg %p11
  $region11: #{f.3} parent=0 // pred_check_branch
    %14 = sbr.rel (%p12) target = $region13
  $region12: #{f.3} parent=0 // pred_region
    %15 = vst [vmem:[#allocation2] sm:$0xff] 0.0
    %16 = vst [vmem:[#allocation2 + $0x8] sm:$0xff] 0.0
    %17 = vst [vmem:[#allocation2 + $0x10] sm:$0xff] 0.0
    %18 = vst [vmem:[#allocation2 + $0x18] sm:$0xff] 0.0
    %19 = vst [vmem:[#allocation2 + $0x20] sm:$0xff] 0.0
    %20 = vst [vmem:[#allocation2 + $0x28] sm:$0xff] 0.0
    %21 = vst [vmem:[#allocation2 + $0x30] sm:$0xff] 0.0
    %22 = vst [vmem:[#allocation2 + $0x38] sm:$0xff] 0.0
    %23 = vst [vmem:[#allocation2 + $0x40] sm:$0xff] 0.0
    %24 = vst [vmem:[#allocation2 + $0x48] sm:$0xff] 0.0
    %25 = vst [vmem:[#allocation2 + $0x50] sm:$0xff] 0.0
    %26 = vst [vmem:[#allocation2 + $0x58] sm:$0xff] 0.0
    %27 = vst [vmem:[#allocation2 + $0x60] sm:$0xff] 0.0
    %28 = vst [vmem:[#allocation2 + $0x68] sm:$0xff] 0.0
    %29 = vst [vmem:[#allocation2 + $0x70] sm:$0xff] 0.0
    %30 = vst [vmem:[#allocation2 + $0x78] sm:$0xff] 0.0
  $region13: #{f.3} parent=0 // pred_fallthru
    _
  %v31 = vld [vmem:[#allocation2] sm:$0xff]
  %v32 = vld [vmem:[#allocation2 + $0x8] sm:$0xff]
  %v33 = vld [vmem:[#allocation2 + $0x10] sm:$0xff]
  %v34 = vld [vmem:[#allocation2 + $0x18] sm:$0xff]
  %v35 = vld [vmem:[#allocation2 + $0x20] sm:$0xff]
  %v36 = vld [vmem:[#allocation2 + $0x28] sm:$0xff]
  %v37 = vld [vmem:[#allocation2 + $0x30] sm:$0xff]
  %v38 = vld [vmem:[#allocation2 + $0x38] sm:$0xff]
  %v39 = vld [vmem:[#allocation2 + $0x40] sm:$0xff]
  %v40 = vld [vmem:[#allocation2 + $0x48] sm:$0xff]
  %v41 = vld [vmem:[#allocation2 + $0x50] sm:$0xff]
  %v42 = vld [vmem:[#allocation2 + $0x58] sm:$0xff]
  %v43 = vld [vmem:[#allocation2 + $0x60] sm:$0xff]
  %v44 = vld [vmem:[#allocation2 + $0x68] sm:$0xff]
  %v45 = vld [vmem:[#allocation2 + $0x70] sm:$0xff]
  %v46 = vld [vmem:[#allocation2 + $0x78] sm:$0xff]
  %v47 = vld [vmem:[%s0] sm:$0xff]
  %v48 = vld [vmem:[%s0 + $0x8] sm:$0xff]
  %v49 = vld [vmem:[%s0 + $0x10] sm:$0xff]
  %v50 = vld [vmem:[%s0 + $0x18] sm:$0xff]
  %v51 = vld [vmem:[%s0 + $0x20] sm:$0xff]
  %v52 = vld [vmem:[%s0 + $0x28] sm:$0xff]
  %v53 = vld [vmem:[%s0 + $0x30] sm:$0xff]
  %v54 = vld [vmem:[%s0 + $0x38] sm:$0xff]
  %v55 = vld [vmem:[%s0 + $0x40] sm:$0xff]
  %v56 = vld [vmem:[%s0 + $0x48] sm:$0xff]
  %v57 = vld [vmem:[%s0 + $0x50] sm:$0xff]
  %v58 = vld [vmem:[%s0 + $0x58] sm:$0xff]
  %v59 = vld [vmem:[%s0 + $0x60] sm:$0xff]
  %v60 = vld [vmem:[%s0 + $0x68] sm:$0xff]
  %v61 = vld [vmem:[%s0 + $0x70] sm:$0xff]
  %v62 = vld [vmem:[%s0 + $0x78] sm:$0xff]
  %v63 = vld [vmem:[%s1] sm:$0xff]
  %v64 = vld [vmem:[%s1 + $0x8] sm:$0xff]
  %v65 = vld [vmem:[%s1 + $0x10] sm:$0xff]
  %v66 = vld [vmem:[%s1 + $0x18] sm:$0xff]
  %v67 = vld [vmem:[%s1 + $0x20] sm:$0xff]
  %v68 = vld [vmem:[%s1 + $0x28] sm:$0xff]
  %v69 = vld [vmem:[%s1 + $0x30] sm:$0xff]
  %v70 = vld [vmem:[%s1 + $0x38] sm:$0xff]
  %v71 = vld [vmem:[%s1 + $0x40] sm:$0xff]
  %v72 = vld [vmem:[%s1 + $0x48] sm:$0xff]
  %v73 = vld [vmem:[%s1 + $0x50] sm:$0xff]
  %v74 = vld [vmem:[%s1 + $0x58] sm:$0xff]
  %v75 = vld [vmem:[%s1 + $0x60] sm:$0xff]
  %v76 = vld [vmem:[%s1 + $0x68] sm:$0xff]
  %v77 = vld [vmem:[%s1 + $0x70] sm:$0xff]
  %v78 = vld [vmem:[%s1 + $0x78] sm:$0xff]
  %79 = vmatprep.subr.mxu0 0.0
  %80 = vmatpush1.msra.mxu0 %v63
  %81 = vmatprep.subr.mxu0 0.0
  %82 = vmatpush1.msra.mxu0 %v64
  %83 = vmatprep.subr.mxu0 0.0
  %84 = vmatpush1.msra.mxu0 %v65
  %85 = vmatprep.subr.mxu0 0.0
  %86 = vmatpush1.msra.mxu0 %v66
  %87 = vmatprep.subr.mxu0 0.0
  %88 = vmatpush1.msra.mxu0 %v67
  %89 = vmatprep.subr.mxu0 0.0
  %90 = vmatpush1.msra.mxu0 %v68
  %91 = vmatprep.subr.mxu0 0.0
  %92 = vmatpush1.msra.mxu0 %v69
  %93 = vmatprep.subr.mxu0 0.0
  %94 = vmatpush1.msra.mxu0 %v70
  %95 = vmatprep.subr.mxu0 0.0
  %96 = vmatpush1.msra.mxu0 %v71
  %97 = vmatprep.subr.mxu0 0.0
  %98 = vmatpush1.msra.mxu0 %v72
  %99 = vmatprep.subr.mxu0 0.0
  %100 = vmatpush1.msra.mxu0 %v73
  %101 = vmatprep.subr.mxu0 0.0
  %102 = vmatpush1.msra.mxu0 %v74
  %103 = vmatprep.subr.mxu0 0.0
  %104 = vmatpush1.msra.mxu0 %v75
  %105 = vmatprep.subr.mxu0 0.0
  %106 = vmatpush1.msra.mxu0 %v76
  %107 = vmatprep.subr.mxu0 0.0
  %108 = vmatpush1.msra.mxu0 %v77
  %109 = vmatprep.subr.mxu0 0.0
  %110 = vmatpush1.msra.mxu0 %v78
  %111 = vmatprep.subr.mxu0 0.0
  %112 = vmatpush1.msra.mxu0 0.0
  %113 = vmatprep.subr.mxu0 0.0
  %114 = vmatpush1.msra.mxu0 0.0
  %115 = vmatprep.subr.mxu0 0.0
  %116 = vmatpush1.msra.mxu0 0.0
  %117 = vmatprep.subr.mxu0 0.0
  %118 = vmatpush1.msra.mxu0 0.0
  %119 = vmatprep.subr.mxu0 0.0
  %120 = vmatpush1.msra.mxu0 0.0
  %121 = vmatprep.subr.mxu0 0.0
  %122 = vmatpush1.msra.mxu0 0.0
  %123 = vmatprep.subr.mxu0 0.0
  %124 = vmatpush1.msra.mxu0 0.0
  %125 = vmatprep.subr.mxu0 0.0
  %126 = vmatpush1.msra.mxu0 0.0
  %127 = vmatprep.subr.mxu0 0.0
  %128 = vmatpush1.msra.mxu0 0.0
  %129 = vmatprep.subr.mxu0 0.0
  %130 = vmatpush1.msra.mxu0 0.0
  %131 = vmatprep.subr.mxu0 0.0
  %132 = vmatpush1.msra.mxu0 0.0
  %133 = vmatprep.subr.mxu0 0.0
  %134 = vmatpush1.msra.mxu0 0.0
  %135 = vmatprep.subr.mxu0 0.0
  %136 = vmatpush1.msra.mxu0 0.0
  %137 = vmatprep.subr.mxu0 0.0
  %138 = vmatpush1.msra.mxu0 0.0
  %139 = vmatprep.subr.mxu0 0.0
  %140 = vmatpush1.msra.mxu0 0.0
  %141 = vmatprep.subr.mxu0 0.0
  %142 = vmatpush1.msra.mxu0 0.0
  %143 = vmatprep.mubr.f32.mxu0 0.0
  %144 = vmatmul.mubr.f32.gmra.mrb[0].mxu0 %v47
  %v145 = vpop.f32.mrb[0].mxu0
  %v146 = vadd.f32 0.0, %v145
  %v147 = vpop.f32.mrb[0].mxu0
  %148 = vmatprep.mubr.f32.mxu0 0.0
  %149 = vmatmul.mubr.f32.gmra.mrb[0].mxu0 %v48
  %v150 = vpop.f32.mrb[0].mxu0
  %v151 = vadd.f32 0.0, %v150
  %v152 = vpop.f32.mrb[0].mxu0
  %153 = vmatprep.mubr.f32.mxu0 0.0
  %154 = vmatmul.mubr.f32.gmra.mrb[0].mxu0 %v49
  %v155 = vpop.f32.mrb[0].mxu0
  %v156 = vadd.f32 0.0, %v155
  %v157 = vpop.f32.mrb[0].mxu0
  %158 = vmatprep.mubr.f32.mxu0 0.0
  %159 = vmatmul.mubr.f32.gmra.mrb[0].mxu0 %v50
  %v160 = vpop.f32.mrb[0].mxu0
  %v161 = vadd.f32 0.0, %v160
  %v162 = vpop.f32.mrb[0].mxu0
  %163 = vmatprep.mubr.f32.mxu0 0.0
  %164 = vmatmul.mubr.f32.gmra.mrb[0].mxu0 %v51
  %v165 = vpop.f32.mrb[0].mxu0
  %v166 = vadd.f32 0.0, %v165
  %v167 = vpop.f32.mrb[0].mxu0
  %168 = vmatprep.mubr.f32.mxu0 0.0
  %169 = vmatmul.mubr.f32.gmra.mrb[0].mxu0 %v52
  %v170 = vpop.f32.mrb[0].mxu0
  %v171 = vadd.f32 0.0, %v170
  %v172 = vpop.f32.mrb[0].mxu0
  %173 = vmatprep.mubr.f32.mxu0 0.0
  %174 = vmatmul.mubr.f32.gmra.mrb[0].mxu0 %v53
  %v175 = vpop.f32.mrb[0].mxu0
  %v176 = vadd.f32 0.0, %v175
  %v177 = vpop.f32.mrb[0].mxu0
  %178 = vmatprep.mubr.f32.mxu0 0.0
  %179 = vmatmul.mubr.f32.gmra.mrb[0].mxu0 %v54
  %v180 = vpop.f32.mrb[0].mxu0
  %v181 = vadd.f32 0.0, %v180
  %v182 = vpop.f32.mrb[0].mxu0
  %183 = vmatprep.mubr.f32.mxu0 0.0
  %184 = vmatmul.mubr.f32.gmra.mrb[0].mxu0 %v55
  %v185 = vpop.f32.mrb[0].mxu0
  %v186 = vadd.f32 0.0, %v185
  %v187 = vpop.f32.mrb[0].mxu0
  %188 = vmatprep.mubr.f32.mxu0 0.0
  %189 = vmatmul.mubr.f32.gmra.mrb[0].mxu0 %v56
  %v190 = vpop.f32.mrb[0].mxu0
  %v191 = vadd.f32 0.0, %v190
  %v192 = vpop.f32.mrb[0].mxu0
  %193 = vmatprep.mubr.f32.mxu0 0.0
  %194 = vmatmul.mubr.f32.gmra.mrb[0].mxu0 %v57
  %v195 = vpop.f32.mrb[0].mxu0
  %v196 = vadd.f32 0.0, %v195
  %v197 = vpop.f32.mrb[0].mxu0
  %198 = vmatprep.mubr.f32.mxu0 0.0
  %199 = vmatmul.mubr.f32.gmra.mrb[0].mxu0 %v58
  %v200 = vpop.f32.mrb[0].mxu0
  %v201 = vadd.f32 0.0, %v200
  %v202 = vpop.f32.mrb[0].mxu0
  %203 = vmatprep.mubr.f32.mxu0 0.0
  %204 = vmatmul.mubr.f32.gmra.mrb[0].mxu0 %v59
  %v205 = vpop.f32.mrb[0].mxu0
  %v206 = vadd.f32 0.0, %v205
  %v207 = vpop.f32.mrb[0].mxu0
  %208 = vmatprep.mubr.f32.mxu0 0.0
  %209 = vmatmul.mubr.f32.gmra.mrb[0].mxu0 %v60
  %v210 = vpop.f32.mrb[0].mxu0
  %v211 = vadd.f32 0.0, %v210
  %v212 = vpop.f32.mrb[0].mxu0
  %213 = vmatprep.mubr.f32.mxu0 0.0
  %214 = vmatmul.mubr.f32.gmra.mrb[0].mxu0 %v61
  %v215 = vpop.f32.mrb[0].mxu0
  %v216 = vadd.f32 0.0, %v215
  %v217 = vpop.f32.mrb[0].mxu0
  %218 = vmatprep.mubr.f32.mxu0 0.0
  %219 = vmatmul.mubr.f32.gmra.mrb[0].mxu0 %v62
  %v220 = vpop.f32.mrb[0].mxu0
  %v221 = vadd.f32 0.0, %v220
  %v222 = vpop.f32.mrb[0].mxu0
  %223 = vdwg.mxu0
  %v224 = vadd.f32 %v31, %v146
  %v225 = vadd.f32 %v32, %v151
  %v226 = vadd.f32 %v33, %v156
  %v227 = vadd.f32 %v34, %v161
  %v228 = vadd.f32 %v35, %v166
  %v229 = vadd.f32 %v36, %v171
  %v230 = vadd.f32 %v37, %v176
  %v231 = vadd.f32 %v38, %v181
  %v232 = vadd.f32 %v39, %v186
  %v233 = vadd.f32 %v40, %v191
  %v234 = vadd.f32 %v41, %v196
  %v235 = vadd.f32 %v42, %v201
  %v236 = vadd.f32 %v43, %v206
  %v237 = vadd.f32 %v44, %v211
  %v238 = vadd.f32 %v45, %v216
  %v239 = vadd.f32 %v46, %v221
  %240 = vst [vmem:[#allocation2] sm:$0xff] %v224
  %241 = vst [vmem:[#allocation2 + $0x8] sm:$0xff] %v225
  %242 = vst [vmem:[#allocation2 + $0x10] sm:$0xff] %v226
  %243 = vst [vmem:[#allocation2 + $0x18] sm:$0xff] %v227
  %244 = vst [vmem:[#allocation2 + $0x20] sm:$0xff] %v228
  %245 = vst [vmem:[#allocation2 + $0x28] sm:$0xff] %v229
  %246 = vst [vmem:[#allocation2 + $0x30] sm:$0xff] %v230
  %247 = vst [vmem:[#allocation2 + $0x38] sm:$0xff] %v231
  %248 = vst [vmem:[#allocation2 + $0x40] sm:$0xff] %v232
  %249 = vst [vmem:[#allocation2 + $0x48] sm:$0xff] %v233
  %250 = vst [vmem:[#allocation2 + $0x50] sm:$0xff] %v234
  %251 = vst [vmem:[#allocation2 + $0x58] sm:$0xff] %v235
  %252 = vst [vmem:[#allocation2 + $0x60] sm:$0xff] %v236
  %253 = vst [vmem:[#allocation2 + $0x68] sm:$0xff] %v237
  %254 = vst [vmem:[#allocation2 + $0x70] sm:$0xff] %v238
  %255 = vst [vmem:[#allocation2 + $0x78] sm:$0xff] %v239
  // Predicated region
  $region14: #{f.3} parent=0 // pred_check
    %p256 = pneg %p11
  $region15: #{f.3} parent=0 // pred_check_branch
    %258 = sbr.rel (%p256) target = $region17
  $region16: #{f.3} parent=0 // pred_region
    %v259 = vld [vmem:[#allocation2] sm:$0xff]
    %v260 = vld [vmem:[#allocation2 + $0x8] sm:$0xff]
    %v261 = vld [vmem:[#allocation2 + $0x10] sm:$0xff]
    %v262 = vld [vmem:[#allocation2 + $0x18] sm:$0xff]
    %v263 = vld [vmem:[#allocation2 + $0x20] sm:$0xff]
    %v264 = vld [vmem:[#allocation2 + $0x28] sm:$0xff]
    %v265 = vld [vmem:[#allocation2 + $0x30] sm:$0xff]
    %v266 = vld [vmem:[#allocation2 + $0x38] sm:$0xff]
    %v267 = vld [vmem:[#allocation2 + $0x40] sm:$0xff]
    %v268 = vld [vmem:[#allocation2 + $0x48] sm:$0xff]
    %v269 = vld [vmem:[#allocation2 + $0x50] sm:$0xff]
    %v270 = vld [vmem:[#allocation2 + $0x58] sm:$0xff]
    %v271 = vld [vmem:[#allocation2 + $0x60] sm:$0xff]
    %v272 = vld [vmem:[#allocation2 + $0x68] sm:$0xff]
    %v273 = vld [vmem:[#allocation2 + $0x70] sm:$0xff]
    %v274 = vld [vmem:[#allocation2 + $0x78] sm:$0xff]
    %275 = vst [vmem:[%s2] sm:$0xff] %v259
    %276 = vst [vmem:[%s2 + $0x8] sm:$0xff] %v260
    %277 = vst [vmem:[%s2 + $0x10] sm:$0xff] %v261
    %278 = vst [vmem:[%s2 + $0x18] sm:$0xff] %v262
    %279 = vst [vmem:[%s2 + $0x20] sm:$0xff] %v263
    %280 = vst [vmem:[%s2 + $0x28] sm:$0xff] %v264
    %281 = vst [vmem:[%s2 + $0x30] sm:$0xff] %v265
    %282 = vst [vmem:[%s2 + $0x38] sm:$0xff] %v266
    %283 = vst [vmem:[%s2 + $0x40] sm:$0xff] %v267
    %284 = vst [vmem:[%s2 + $0x48] sm:$0xff] %v268
    %285 = vst [vmem:[%s2 + $0x50] sm:$0xff] %v269
    %286 = vst [vmem:[%s2 + $0x58] sm:$0xff] %v270
    %287 = vst [vmem:[%s2 + $0x60] sm:$0xff] %v271
    %288 = vst [vmem:[%s2 + $0x68] sm:$0xff] %v272
    %289 = vst [vmem:[%s2 + $0x70] sm:$0xff] %v273
    %290 = vst [vmem:[%s2 + $0x78] sm:$0xff] %v274
  $region17: #{f.3} parent=0 // pred_fallthru
    _
  // Predicated region
  $region18: #{f.3} parent=0 // pred_check
    _
  $region19: #{f.3} parent=0 // pred_check_branch
    %292 = sbr.rel (0) target = $region21
  $region20: #{f.3} parent=0 // pred_region
    _
  $region21: #{f.3} parent=0 // pred_fallthru
    _
  // Predicated region
  $region22: #{f.3} parent=0 // pred_check
    _
  $region23: #{f.3} parent=0 // pred_check_branch
    %294 = sbr.rel (0) target = $region25
  $region24: #{f.3} parent=0 // pred_region
    _
  $region25: #{f.3} parent=0 // pred_fallthru
    _

// kernel: f.2
$region0: #{f.2}
  #allocation0 [shape = 'u32[]', space=smem, size = 0x4, offset = 0x4, fixed_abs, tag = 'smem constant byte address 0x4 - core index']
  #allocation1 [shape = 'u32[144,128]{1,0:T(1,128)}', space=vmem, size = 0x12000, scoped, tag = 'internal scratch']
  #allocation2 [shape = 'f32[128,128]{1,0:T(8,128)}', space=vmem, size = 0x10000, scoped, tag = 'scratch operand']
  %s0 = inlined_call_operand.hbm [shape: f32[128,128], index: 0, kind: input, shape index: {}]
  %s1 = inlined_call_operand.hbm [shape: f32[128,128], index: 1, kind: input, shape index: {}]
  %s2 = inlined_call_operand.vmem [shape: f32[128,128], index: 2, kind: output, shape index: {}]
  %s3 = sld [smem:[#allocation0]]
  $region34: #{f.2} parent=0
    _
  %s5 = ssub.s32 1, %s3
  %s6 = scalar_select 0, %s5, %s3
  $region1: #{f.2} parent=0
    #allocation3 [shape = 'u8[65536]{0}', space=vmem, size = 0x10000, scoped, tag = 'input window, operand 0, single buffered']
    #allocation4 [shape = 's32[1]{0}', space=sflag, size = 0x4, scoped, tag = 'scoped memory for f.2']
    #allocation5 [shape = 'u8[65536]{0}', space=vmem, size = 0x10000, scoped, tag = 'input window, operand 1, single buffered']
    #allocation6 [shape = 's32[1]{0}', space=sflag, size = 0x4, scoped, tag = 'scoped memory for f.2']
    %7 = vsyncpa [#allocation4], 0
    %8 = vsyncpa [#allocation6], 0
    // Predicated region
    $region2: #{f.2} parent=1 // pred_check
      _
    $region3: #{f.2} parent=1 // pred_check_branch
      %10 = sbr.rel (0) target = $region5
    $region4: #{f.2} parent=1 // pred_region
      %s12 = ssub.s32 2048, 2048
      %13 = vsyncadd [#allocation4], %s12
      %s14 = sshll.u32 [#allocation3], 4
      %s15 = int_to_ptr.vmem [resolvable:$true] %s14
      %20 = dma.hbm_to_vmem [thread:$0]  %s0, 2048, %s15, [#allocation4], 128, 128, 8
    $region5: #{f.2} parent=1 // pred_fallthru
      _
    // Predicated region
    $region6: #{f.2} parent=1 // pred_check
      _
    $region7: #{f.2} parent=1 // pred_check_branch
      %22 = sbr.rel (0) target = $region9
    $region8: #{f.2} parent=1 // pred_region
      %s24 = ssub.s32 2048, 2048
      %25 = vsyncadd [#allocation6], %s24
      %s26 = sshll.u32 [#allocation5], 4
      %s27 = int_to_ptr.vmem [resolvable:$true] %s26
      %32 = dma.hbm_to_vmem [thread:$0]  %s1, 2048, %s27, [#allocation6], 128, 128, 8
    $region9: #{f.2} parent=1 // pred_fallthru
      _
    // Predicated region
    $region10: #{f.2} parent=1 // pred_check
      _
    $region11: #{f.2} parent=1 // pred_check_branch
      %34 = sbr.rel (0) target = $region13
    $region12: #{f.2} parent=1 // pred_region
      %35 = dma.done [#allocation4], 2048
    $region13: #{f.2} parent=1 // pred_fallthru
      _
    // Predicated region
    $region14: #{f.2} parent=1 // pred_check
      _
    $region15: #{f.2} parent=1 // pred_check_branch
      %37 = sbr.rel (0) target = $region17
    $region16: #{f.2} parent=1 // pred_region
      %38 = dma.done [#allocation6], 2048
    $region17: #{f.2} parent=1 // pred_fallthru
      _
    %p39 = scmp.eq.s32.totalorder 0, 0
    // Predicated region
    $region18: #{f.2} parent=1 // pred_check
      %p40 = pneg %p39
    $region19: #{f.2} parent=1 // pred_check_branch
      %42 = sbr.rel (%p40) target = $region21
    $region20: #{f.2} parent=1 // pred_region
      %43 = vst [vmem:[#allocation2] sm:$0xff] 0.0
      %44 = vst [vmem:[#allocation2 + $0x8] sm:$0xff] 0.0
      %45 = vst [vmem:[#allocation2 + $0x10] sm:$0xff] 0.0
      %46 = vst [vmem:[#allocation2 + $0x18] sm:$0xff] 0.0
      %47 = vst [vmem:[#allocation2 + $0x20] sm:$0xff] 0.0
      %48 = vst [vmem:[#allocation2 + $0x28] sm:$0xff] 0.0
      %49 = vst [vmem:[#allocation2 + $0x30] sm:$0xff] 0.0
      %50 = vst [vmem:[#allocation2 + $0x38] sm:$0xff] 0.0
      %51 = vst [vmem:[#allocation2 + $0x40] sm:$0xff] 0.0
      %52 = vst [vmem:[#allocation2 + $0x48] sm:$0xff] 0.0
      %53 = vst [vmem:[#allocation2 + $0x50] sm:$0xff] 0.0
      %54 = vst [vmem:[#allocation2 + $0x58] sm:$0xff] 0.0
      %55 = vst [vmem:[#allocation2 + $0x60] sm:$0xff] 0.0
      %56 = vst [vmem:[#allocation2 + $0x68] sm:$0xff] 0.0
      %57 = vst [vmem:[#allocation2 + $0x70] sm:$0xff] 0.0
      %58 = vst [vmem:[#allocation2 + $0x78] sm:$0xff] 0.0
    $region21: #{f.2} parent=1 // pred_fallthru
      _
    %v59 = vld [vmem:[#allocation2] sm:$0xff]
    %v60 = vld [vmem:[#allocation2 + $0x8] sm:$0xff]
    %v61 = vld [vmem:[#allocation2 + $0x10] sm:$0xff]
    %v62 = vld [vmem:[#allocation2 + $0x18] sm:$0xff]
    %v63 = vld [vmem:[#allocation2 + $0x20] sm:$0xff]
    %v64 = vld [vmem:[#allocation2 + $0x28] sm:$0xff]
    %v65 = vld [vmem:[#allocation2 + $0x30] sm:$0xff]
    %v66 = vld [vmem:[#allocation2 + $0x38] sm:$0xff]
    %v67 = vld [vmem:[#allocation2 + $0x40] sm:$0xff]
    %v68 = vld [vmem:[#allocation2 + $0x48] sm:$0xff]
    %v69 = vld [vmem:[#allocation2 + $0x50] sm:$0xff]
    %v70 = vld [vmem:[#allocation2 + $0x58] sm:$0xff]
    %v71 = vld [vmem:[#allocation2 + $0x60] sm:$0xff]
    %v72 = vld [vmem:[#allocation2 + $0x68] sm:$0xff]
    %v73 = vld [vmem:[#allocation2 + $0x70] sm:$0xff]
    %v74 = vld [vmem:[#allocation2 + $0x78] sm:$0xff]
    %v75 = vld [vmem:[#allocation3] sm:$0xff]
    %v76 = vld [vmem:[#allocation3 + $0x8] sm:$0xff]
    %v77 = vld [vmem:[#allocation3 + $0x10] sm:$0xff]
    %v78 = vld [vmem:[#allocation3 + $0x18] sm:$0xff]
    %v79 = vld [vmem:[#allocation3 + $0x20] sm:$0xff]
    %v80 = vld [vmem:[#allocation3 + $0x28] sm:$0xff]
    %v81 = vld [vmem:[#allocation3 + $0x30] sm:$0xff]
    %v82 = vld [vmem:[#allocation3 + $0x38] sm:$0xff]
    %v83 = vld [vmem:[#allocation3 + $0x40] sm:$0xff]
    %v84 = vld [vmem:[#allocation3 + $0x48] sm:$0xff]
    %v85 = vld [vmem:[#allocation3 + $0x50] sm:$0xff]
    %v86 = vld [vmem:[#allocation3 + $0x58] sm:$0xff]
    %v87 = vld [vmem:[#allocation3 + $0x60] sm:$0xff]
    %v88 = vld [vmem:[#allocation3 + $0x68] sm:$0xff]
    %v89 = vld [vmem:[#allocation3 + $0x70] sm:$0xff]
    %v90 = vld [vmem:[#allocation3 + $0x78] sm:$0xff]
    %v91 = vld [vmem:[#allocation5] sm:$0xff]
    %v92 = vld [vmem:[#allocation5 + $0x8] sm:$0xff]
    %v93 = vld [vmem:[#allocation5 + $0x10] sm:$0xff]
    %v94 = vld [vmem:[#allocation5 + $0x18] sm:$0xff]
    %v95 = vld [vmem:[#allocation5 + $0x20] sm:$0xff]
    %v96 = vld [vmem:[#allocation5 + $0x28] sm:$0xff]
    %v97 = vld [vmem:[#allocation5 + $0x30] sm:$0xff]
    %v98 = vld [vmem:[#allocation5 + $0x38] sm:$0xff]
    %v99 = vld [vmem:[#allocation5 + $0x40] sm:$0xff]
    %v100 = vld [vmem:[#allocation5 + $0x48] sm:$0xff]
    %v101 = vld [vmem:[#allocation5 + $0x50] sm:$0xff]
    %v102 = vld [vmem:[#allocation5 + $0x58] sm:$0xff]
    %v103 = vld [vmem:[#allocation5 + $0x60] sm:$0xff]
    %v104 = vld [vmem:[#allocation5 + $0x68] sm:$0xff]
    %v105 = vld [vmem:[#allocation5 + $0x70] sm:$0xff]
    %v106 = vld [vmem:[#allocation5 + $0x78] sm:$0xff]
    %107 = vmatprep.subr.mxu0 0.0
    %108 = vmatpush1.msra.mxu0 %v91
    %109 = vmatprep.subr.mxu0 0.0
    %110 = vmatpush1.msra.mxu0 %v92
    %111 = vmatprep.subr.mxu0 0.0
    %112 = vmatpush1.msra.mxu0 %v93
    %113 = vmatprep.subr.mxu0 0.0
    %114 = vmatpush1.msra.mxu0 %v94
    %115 = vmatprep.subr.mxu0 0.0
    %116 = vmatpush1.msra.mxu0 %v95
    %117 = vmatprep.subr.mxu0 0.0
    %118 = vmatpush1.msra.mxu0 %v96
    %119 = vmatprep.subr.mxu0 0.0
    %120 = vmatpush1.msra.mxu0 %v97
    %121 = vmatprep.subr.mxu0 0.0
    %122 = vmatpush1.msra.mxu0 %v98
    %123 = vmatprep.subr.mxu0 0.0
    %124 = vmatpush1.msra.mxu0 %v99
    %125 = vmatprep.subr.mxu0 0.0
    %126 = vmatpush1.msra.mxu0 %v100
    %127 = vmatprep.subr.mxu0 0.0
    %128 = vmatpush1.msra.mxu0 %v101
    %129 = vmatprep.subr.mxu0 0.0
    %130 = vmatpush1.msra.mxu0 %v102
    %131 = vmatprep.subr.mxu0 0.0
    %132 = vmatpush1.msra.mxu0 %v103
    %133 = vmatprep.subr.mxu0 0.0
    %134 = vmatpush1.msra.mxu0 %v104
    %135 = vmatprep.subr.mxu0 0.0
    %136 = vmatpush1.msra.mxu0 %v105
    %137 = vmatprep.subr.mxu0 0.0
    %138 = vmatpush1.msra.mxu0 %v106
    %139 = vmatprep.subr.mxu0 0.0
    %140 = vmatpush1.msra.mxu0 0.0
    %141 = vmatprep.subr.mxu0 0.0
    %142 = vmatpush1.msra.mxu0 0.0
    %143 = vmatprep.subr.mxu0 0.0
    %144 = vmatpush1.msra.mxu0 0.0
    %145 = vmatprep.subr.mxu0 0.0
    %146 = vmatpush1.msra.mxu0 0.0
    %147 = vmatprep.subr.mxu0 0.0
    %148 = vmatpush1.msra.mxu0 0.0
    %149 = vmatprep.subr.mxu0 0.0
    %150 = vmatpush1.msra.mxu0 0.0
    %151 = vmatprep.subr.mxu0 0.0
    %152 = vmatpush1.msra.mxu0 0.0
    %153 = vmatprep.subr.mxu0 0.0
    %154 = vmatpush1.msra.mxu0 0.0
    %155 = vmatprep.subr.mxu0 0.0
    %156 = vmatpush1.msra.mxu0 0.0
    %157 = vmatprep.subr.mxu0 0.0
    %158 = vmatpush1.msra.mxu0 0.0
    %159 = vmatprep.subr.mxu0 0.0
    %160 = vmatpush1.msra.mxu0 0.0
    %161 = vmatprep.subr.mxu0 0.0
    %162 = vmatpush1.msra.mxu0 0.0
    %163 = vmatprep.subr.mxu0 0.0
    %164 = vmatpush1.msra.mxu0 0.0
    %165 = vmatprep.subr.mxu0 0.0
    %166 = vmatpush1.msra.mxu0 0.0
    %167 = vmatprep.subr.mxu0 0.0
    %168 = vmatpush1.msra.mxu0 0.0
    %169 = vmatprep.subr.mxu0 0.0
    %170 = vmatpush1.msra.mxu0 0.0
    %171 = vmatprep.mubr.f32.mxu0 0.0
    %172 = vmatmul.mubr.f32.gmra.mrb[0].mxu0 %v75
    %v173 = vpop.f32.mrb[0].mxu0
    %v174 = vadd.f32 0.0, %v173
    %v175 = vpop.f32.mrb[0].mxu0
    %176 = vmatprep.mubr.f32.mxu0 0.0
    %177 = vmatmul.mubr.f32.gmra.mrb[0].mxu0 %v76
    %v178 = vpop.f32.mrb[0].mxu0
    %v179 = vadd.f32 0.0, %v178
    %v180 = vpop.f32.mrb[0].mxu0
    %181 = vmatprep.mubr.f32.mxu0 0.0
    %182 = vmatmul.mubr.f32.gmra.mrb[0].mxu0 %v77
    %v183 = vpop.f32.mrb[0].mxu0
    %v184 = vadd.f32 0.0, %v183
    %v185 = vpop.f32.mrb[0].mxu0
    %186 = vmatprep.mubr.f32.mxu0 0.0
    %187 = vmatmul.mubr.f32.gmra.mrb[0].mxu0 %v78
    %v188 = vpop.f32.mrb[0].mxu0
    %v189 = vadd.f32 0.0, %v188
    %v190 = vpop.f32.mrb[0].mxu0
    %191 = vmatprep.mubr.f32.mxu0 0.0
    %192 = vmatmul.mubr.f32.gmra.mrb[0].mxu0 %v79
    %v193 = vpop.f32.mrb[0].mxu0
    %v194 = vadd.f32 0.0, %v193
    %v195 = vpop.f32.mrb[0].mxu0
    %196 = vmatprep.mubr.f32.mxu0 0.0
    %197 = vmatmul.mubr.f32.gmra.mrb[0].mxu0 %v80
    %v198 = vpop.f32.mrb[0].mxu0
    %v199 = vadd.f32 0.0, %v198
    %v200 = vpop.f32.mrb[0].mxu0
    %201 = vmatprep.mubr.f32.mxu0 0.0
    %202 = vmatmul.mubr.f32.gmra.mrb[0].mxu0 %v81
    %v203 = vpop.f32.mrb[0].mxu0
    %v204 = vadd.f32 0.0, %v203
    %v205 = vpop.f32.mrb[0].mxu0
    %206 = vmatprep.mubr.f32.mxu0 0.0
    %207 = vmatmul.mubr.f32.gmra.mrb[0].mxu0 %v82
    %v208 = vpop.f32.mrb[0].mxu0
    %v209 = vadd.f32 0.0, %v208
    %v210 = vpop.f32.mrb[0].mxu0
    %211 = vmatprep.mubr.f32.mxu0 0.0
    %212 = vmatmul.mubr.f32.gmra.mrb[0].mxu0 %v83
    %v213 = vpop.f32.mrb[0].mxu0
    %v214 = vadd.f32 0.0, %v213
    %v215 = vpop.f32.mrb[0].mxu0
    %216 = vmatprep.mubr.f32.mxu0 0.0
    %217 = vmatmul.mubr.f32.gmra.mrb[0].mxu0 %v84
    %v218 = vpop.f32.mrb[0].mxu0
    %v219 = vadd.f32 0.0, %v218
    %v220 = vpop.f32.mrb[0].mxu0
    %221 = vmatprep.mubr.f32.mxu0 0.0
    %222 = vmatmul.mubr.f32.gmra.mrb[0].mxu0 %v85
    %v223 = vpop.f32.mrb[0].mxu0
    %v224 = vadd.f32 0.0, %v223
    %v225 = vpop.f32.mrb[0].mxu0
    %226 = vmatprep.mubr.f32.mxu0 0.0
    %227 = vmatmul.mubr.f32.gmra.mrb[0].mxu0 %v86
    %v228 = vpop.f32.mrb[0].mxu0
    %v229 = vadd.f32 0.0, %v228
    %v230 = vpop.f32.mrb[0].mxu0
    %231 = vmatprep.mubr.f32.mxu0 0.0
    %232 = vmatmul.mubr.f32.gmra.mrb[0].mxu0 %v87
    %v233 = vpop.f32.mrb[0].mxu0
    %v234 = vadd.f32 0.0, %v233
    %v235 = vpop.f32.mrb[0].mxu0
    %236 = vmatprep.mubr.f32.mxu0 0.0
    %237 = vmatmul.mubr.f32.gmra.mrb[0].mxu0 %v88
    %v238 = vpop.f32.mrb[0].mxu0
    %v239 = vadd.f32 0.0, %v238
    %v240 = vpop.f32.mrb[0].mxu0
    %241 = vmatprep.mubr.f32.mxu0 0.0
    %242 = vmatmul.mubr.f32.gmra.mrb[0].mxu0 %v89
    %v243 = vpop.f32.mrb[0].mxu0
    %v244 = vadd.f32 0.0, %v243
    %v245 = vpop.f32.mrb[0].mxu0
    %246 = vmatprep.mubr.f32.mxu0 0.0
    %247 = vmatmul.mubr.f32.gmra.mrb[0].mxu0 %v90
    %v248 = vpop.f32.mrb[0].mxu0
    %v249 = vadd.f32 0.0, %v248
    %v250 = vpop.f32.mrb[0].mxu0
    %251 = vdwg.mxu0
    %v252 = vadd.f32 %v59, %v174
    %v253 = vadd.f32 %v60, %v179
    %v254 = vadd.f32 %v61, %v184
    %v255 = vadd.f32 %v62, %v189
    %v256 = vadd.f32 %v63, %v194
    %v257 = vadd.f32 %v64, %v199
    %v258 = vadd.f32 %v65, %v204
    %v259 = vadd.f32 %v66, %v209
    %v260 = vadd.f32 %v67, %v214
    %v261 = vadd.f32 %v68, %v219
    %v262 = vadd.f32 %v69, %v224
    %v263 = vadd.f32 %v70, %v229
    %v264 = vadd.f32 %v71, %v234
    %v265 = vadd.f32 %v72, %v239
    %v266 = vadd.f32 %v73, %v244
    %v267 = vadd.f32 %v74, %v249
    %268 = vst [vmem:[#allocation2] sm:$0xff] %v252
    %269 = vst [vmem:[#allocation2 + $0x8] sm:$0xff] %v253
    %270 = vst [vmem:[#allocation2 + $0x10] sm:$0xff] %v254
    %271 = vst [vmem:[#allocation2 + $0x18] sm:$0xff] %v255
    %272 = vst [vmem:[#allocation2 + $0x20] sm:$0xff] %v256
    %273 = vst [vmem:[#allocation2 + $0x28] sm:$0xff] %v257
    %274 = vst [vmem:[#allocation2 + $0x30] sm:$0xff] %v258
    %275 = vst [vmem:[#allocation2 + $0x38] sm:$0xff] %v259
    %276 = vst [vmem:[#allocation2 + $0x40] sm:$0xff] %v260
    %277 = vst [vmem:[#allocation2 + $0x48] sm:$0xff] %v261
    %278 = vst [vmem:[#allocation2 + $0x50] sm:$0xff] %v262
    %279 = vst [vmem:[#allocation2 + $0x58] sm:$0xff] %v263
    %280 = vst [vmem:[#allocation2 + $0x60] sm:$0xff] %v264
    %281 = vst [vmem:[#allocation2 + $0x68] sm:$0xff] %v265
    %282 = vst [vmem:[#allocation2 + $0x70] sm:$0xff] %v266
    %283 = vst [vmem:[#allocation2 + $0x78] sm:$0xff] %v267
    // Predicated region
    $region22: #{f.2} parent=1 // pred_check
      %p284 = pneg %p39
    $region23: #{f.2} parent=1 // pred_check_branch
      %286 = sbr.rel (%p284) target = $region25
    $region24: #{f.2} parent=1 // pred_region
      %v287 = vld [vmem:[#allocation2] sm:$0xff]
      %v288 = vld [vmem:[#allocation2 + $0x8] sm:$0xff]
      %v289 = vld [vmem:[#allocation2 + $0x10] sm:$0xff]
      %v290 = vld [vmem:[#allocation2 + $0x18] sm:$0xff]
      %v291 = vld [vmem:[#allocation2 + $0x20] sm:$0xff]
      %v292 = vld [vmem:[#allocation2 + $0x28] sm:$0xff]
      %v293 = vld [vmem:[#allocation2 + $0x30] sm:$0xff]
      %v294 = vld [vmem:[#allocation2 + $0x38] sm:$0xff]
      %v295 = vld [vmem:[#allocation2 + $0x40] sm:$0xff]
      %v296 = vld [vmem:[#allocation2 + $0x48] sm:$0xff]
      %v297 = vld [vmem:[#allocation2 + $0x50] sm:$0xff]
      %v298 = vld [vmem:[#allocation2 + $0x58] sm:$0xff]
      %v299 = vld [vmem:[#allocation2 + $0x60] sm:$0xff]
      %v300 = vld [vmem:[#allocation2 + $0x68] sm:$0xff]
      %v301 = vld [vmem:[#allocation2 + $0x70] sm:$0xff]
      %v302 = vld [vmem:[#allocation2 + $0x78] sm:$0xff]
      %303 = vst [vmem:[%s2] sm:$0xff] %v287
      %304 = vst [vmem:[%s2 + $0x8] sm:$0xff] %v288
      %305 = vst [vmem:[%s2 + $0x10] sm:$0xff] %v289
      %306 = vst [vmem:[%s2 + $0x18] sm:$0xff] %v290
      %307 = vst [vmem:[%s2 + $0x20] sm:$0xff] %v291
      %308 = vst [vmem:[%s2 + $0x28] sm:$0xff] %v292
      %309 = vst [vmem:[%s2 + $0x30] sm:$0xff] %v293
      %310 = vst [vmem:[%s2 + $0x38] sm:$0xff] %v294
      %311 = vst [vmem:[%s2 + $0x40] sm:$0xff] %v295
      %312 = vst [vmem:[%s2 + $0x48] sm:$0xff] %v296
      %313 = vst [vmem:[%s2 + $0x50] sm:$0xff] %v297
      %314 = vst [vmem:[%s2 + $0x58] sm:$0xff] %v298
      %315 = vst [vmem:[%s2 + $0x60] sm:$0xff] %v299
      %316 = vst [vmem:[%s2 + $0x68] sm:$0xff] %v300
      %317 = vst [vmem:[%s2 + $0x70] sm:$0xff] %v301
      %318 = vst [vmem:[%s2 + $0x78] sm:$0xff] %v302
    $region25: #{f.2} parent=1 // pred_fallthru
      _
    // Predicated region
    $region26: #{f.2} parent=1 // pred_check
      _
    $region27: #{f.2} parent=1 // pred_check_branch
      %320 = sbr.rel (0) target = $region29
    $region28: #{f.2} parent=1 // pred_region
      _
    $region29: #{f.2} parent=1 // pred_fallthru
      _
    // Predicated region
    $region30: #{f.2} parent=1 // pred_check
      _
    $region31: #{f.2} parent=1 // pred_check_branch
      %322 = sbr.rel (0) target = $region33
    $region32: #{f.2} parent=1 // pred_region
      _
    $region33: #{f.2} parent=1 // pred_fallthru
      _
    %323 = vsyncpa [#allocation4], 1
    %324 = vsyncpa [#allocation6], 1

</llo_original>
